<compile_context>
chip_gen: v7x
topology: tpu7x:2x2x1
jax: 0.10.0
libtpu: 0.0.40
codegen_flags: <defaults>
</compile_context>

<pallas_src>
import functools

import jax
import jax.numpy as jnp
from jax.experimental import pallas as pl
from jax.experimental.pallas import tpu as pltpu

_LANE = 128
_CHUNK = 512      # output columns per inner dot: bounds vreg live range
_MAX_TM = 256     # max batch tile (multiple of 8)


def _round_up(x, m):
    return ((x + m - 1) // m) * m


def _device_kind():
    try:
        return jax.devices()[0].device_kind.lower()
    except Exception:
        return ""


def _vmem_capacity_bytes(kind):
    # Generation-aware physical VMEM (v7x: 64 MiB/TC, v5e/v6e: 128 MiB).
    try:
        return int(pltpu.get_tpu_info().vmem_capacity_bytes)
    except Exception:
        return (64 << 20) if "v7" in kind else (128 << 20)


def _step_bytes_target(kind):
    # HBM bytes streamed per grid step for the entity-table tile.  Sized so
    # the ~0.35 us per-step pipeline overhead is well amortized at each
    # generation's HBM bandwidth (v5e ~0.8, v6e ~1.4, v7x ~3.2 TB/s).
    if "v7" in kind:
        return 12 << 20
    if "v6" in kind:
        return 6 << 20
    if "v5" in kind:
        return 3 << 20
    return 4 << 20


def _complex_score_kernel(x_ref, wt_ref, o_ref):
    """scores tile = x @ W_tile, consumed in lane-dense sub-chunks.

    x_ref : [tm, 2D]  interaction features (resident while j varies)
    wt_ref: [2D, tn]  pre-transposed entity-table tile (streamed from HBM)
    o_ref : [tm, tn]  f32 scores
    """
    tn = wt_ref.shape[1]
    chunk = min(_CHUNK, tn)          # tn % chunk == 0 by construction
    n_chunks = tn // chunk
    x = x_ref[...]

    def body(c, carry):
        off = pl.multiple_of(c * chunk, chunk)
        o_ref[:, pl.ds(off, chunk)] = jnp.dot(
            x, wt_ref[:, pl.ds(off, chunk)],
            preferred_element_type=jnp.float32,
        ).astype(o_ref.dtype)
        return carry

    # Chunked dots keep vreg pressure small (one f32 vreg per 128 output
    # lanes at tm=8) while the BlockSpec DMA tile stays multi-MiB —
    # decouples DMA block size from vector-register live range.
    jax.lax.fori_loop(0, n_chunks, body, 0,
                      unroll=True if n_chunks <= 8 else 8)


@functools.partial(
    jax.jit, static_argnames=("num_entities", "tn", "tm", "vmem_limit"))
def _complex_forward(heads, relations, entity_w, relation_w, w_score_t, *,
                     num_entities, tn, tm, vmem_limit):
    B = heads.shape[0]
    E = num_entities
    two_d = entity_w.shape[1]
    d = two_d // 2
    e_pad = w_score_t.shape[1]

    # Glue (grid-invariant, hoisted out of the kernel): embedding gathers and
    # the one-shot ComplEx interaction, computed in f32 then cast to the
    # streaming dtype (bf16 by default).
    h = entity_w[heads]
    r = relation_w[relations]
    h1, h2 = h[:, :d], h[:, d:]
    r1, r2 = r[:, :d], r[:, d:]
    x = jnp.concatenate([h1 * r1 - h2 * r2, h2 * r1 + h1 * r2], axis=-1)
    x = x.astype(w_score_t.dtype)

    b_pad = pl.cdiv(B, tm) * tm
    if b_pad != B:
        x = jnp.pad(x, ((0, b_pad - B), (0, 0)))
    grid_m = b_pad // tm
    grid_n = e_pad // tn

    out = pl.pallas_call(
        _complex_score_kernel,
        out_shape=jax.ShapeDtypeStruct((b_pad, e_pad), jnp.float32),
        grid_spec=pltpu.PrefetchScalarGridSpec(
            num_scalar_prefetch=0,
            grid=(grid_m, grid_n),
            in_specs=[
                # x: resident across the streamed entity axis (same block
                # index for all j, so it is not re-fetched per step).
                pl.BlockSpec((tm, two_d), lambda i, j: (i, 0)),
                # TODO(synk): on v7x, sweep pipeline_mode=pl.Buffered(3) here
                # if xprof still shows exposed DMA between grid steps.
                pl.BlockSpec((two_d, tn), lambda i, j: (0, j)),
            ],
            out_specs=pl.BlockSpec((tm, tn), lambda i, j: (i, j)),
        ),
        compiler_params=pltpu.CompilerParams(
            dimension_semantics=("parallel", "parallel"),
            vmem_limit_bytes=vmem_limit,
        ),
        cost_estimate=pl.CostEstimate(
            flops=2 * b_pad * two_d * e_pad,
            bytes_accessed=(e_pad * two_d * w_score_t.dtype.itemsize
                            + b_pad * two_d * x.dtype.itemsize
                            + b_pad * e_pad * 4),
            transcendentals=0,
        ),
    )(x, w_score_t)

    if b_pad != B or e_pad != E:
        out = out[:B, :E]
    return out


class ComplExPallas:
    """ComplEx scorer with a cached, kernel-ready entity table.

    The entity table is prepared ONCE at construction (bf16 cast, pad to the
    tile grid, transpose to [2D, E_pad]); each forward call is a single
    HBM-streaming pallas_call plus tiny gather/interaction glue.
    """

    def __init__(self, entity_w, relation_w, *, score_dtype=jnp.bfloat16,
                 max_batch_tile=_MAX_TM, batch_hint=64):
        E, two_d = entity_w.shape
        assert two_d % 2 == 0, "embedding width must be even (real/imag halves)"
        self.entity_w = jnp.asarray(entity_w, jnp.float32)
        self.relation_w = jnp.asarray(relation_w, jnp.float32)
        self.num_entities = int(E)
        self.two_d = int(two_d)
        self.score_dtype = jnp.dtype(score_dtype)
        self.max_batch_tile = max(8, (int(max_batch_tile) // 8) * 8)

        kind = _device_kind()
        self.is_v7x = "v7" in kind
        vmem_cap = _vmem_capacity_bytes(kind)
        # Leave ~1/8 of physical VMEM as headroom for compiler scratch.
        self.vmem_upper = max(32 << 20, (vmem_cap // 8) * 7)
        self.step_bytes = _step_bytes_target(kind)

        self.tn = self._pick_tn(batch_hint)
        grid_n = pl.cdiv(self.num_entities, self.tn)
        self.e_pad = grid_n * self.tn

        # One-time table prep (cached on device): pad -> cast -> transpose.
        # Pre-transposed [2D, E_pad] layout means the kernel contracts
        # (1,)x(0,) directly, so no per-step weight-tile transpose exists.
        w = self.entity_w
        if self.e_pad != self.num_entities:
            w = jnp.pad(w, ((0, self.e_pad - self.num_entities), (0, 0)))
        self.w_score_t = jnp.transpose(w.astype(self.score_dtype))

    def _footprint(self, tm, tn):
        w_item = self.score_dtype.itemsize
        return (2 * self.two_d * tn * w_item       # W tile, double-buffered
                + 2 * tm * self.two_d * w_item     # x tile, double-buffered
                + 2 * tm * tn * 4                  # f32 out tile, double-buffered
                + (4 << 20))                       # headroom

    def _pick_tn(self, batch_hint):
        E, two_d = self.num_entities, self.two_d
        w_item = self.score_dtype.itemsize
        e_lane = _round_up(E, _LANE)
        if e_lane <= _CHUNK:
            return e_lane                          # tiny table: single tile
        tm_nom = min(max(int(batch_hint), 8), self.max_batch_tile)

        # Multi-MiB, lane-dense, CHUNK-divisible entity tile.
        tn = max(_CHUNK,
                 (self.step_bytes // (two_d * w_item)) // _CHUNK * _CHUNK)
        tn = min(tn, _round_up(e_lane, _CHUNK))
        while tn > _CHUNK and self._footprint(tm_nom, tn) > self.vmem_upper:
            tn -= _CHUNK
        if self.is_v7x:
            # Keep >= 4 entity blocks so megacore feeds both TensorCores.
            while pl.cdiv(E, tn) < 4 and tn > _CHUNK:
                tn = max(_CHUNK, ((tn // 2) // _CHUNK) * _CHUNK)
        # Rebalance: keep the block count, minimize final-block padding.
        grid_n = pl.cdiv(E, tn)
        tn = min(tn, _round_up(pl.cdiv(E, grid_n), _CHUNK))
        return tn

    def __call__(self, heads, relations):
        B = int(heads.shape[0])
        tm = B if B <= self.max_batch_tile else self.max_batch_tile
        # Shrink the batch tile (multiples of 8) until everything fits VMEM;
        # the batch tile does not affect the cached table layout.
        while tm > 8 and self._footprint(tm, self.tn) > self.vmem_upper:
            tm = max(8, ((tm // 2) // 8) * 8)
        vmem_limit = int(min(max(self._footprint(tm, self.tn), 16 << 20),
                             self.vmem_upper))
        return _complex_forward(
            heads, relations, self.entity_w, self.relation_w, self.w_score_t,
            num_entities=self.num_entities, tn=self.tn, tm=tm,
            vmem_limit=vmem_limit)


def complex_reference(heads, relations, entity_w, relation_w):
    h = entity_w[heads]
    r = relation_w[relations]
    d = h.shape[-1] // 2
    h1, h2 = h[:, :d], h[:, d:]
    r1, r2 = r[:, :d], r[:, d:]
    x = jnp.concatenate([h1 * r1 - h2 * r2, h2 * r1 + h1 * r2], axis=-1)
    return x @ entity_w.T


if __name__ == "__main__":
    num_entities = 256
    num_relations = 16
    dimension = 64          # embedding dim D; tables are [*, 2D]
    batch = 8

    key = jax.random.PRNGKey(0)
    k_e, k_r, k_h, k_rel = jax.random.split(key, 4)
    scale = 0.01
    entity_w = jax.random.uniform(
        k_e, (num_entities, dimension * 2), jnp.float32, -scale, scale)
    relation_w = jax.random.uniform(
        k_r, (num_relations, dimension * 2), jnp.float32, -scale, scale)
    heads = jax.random.randint(k_h, (batch,), 0, num_entities, jnp.int32)
    relations = jax.random.randint(k_rel, (batch,), 0, num_relations, jnp.int32)

    model = ComplExPallas(entity_w, relation_w, batch_hint=batch)
    scores = model(heads, relations)
    jax.block_until_ready(scores)

    ref = complex_reference(heads, relations, entity_w, relation_w)
    assert scores.shape == (batch, num_entities), scores.shape
    # Table and x are streamed in bf16 (f32 MXU accumulation), so compare to
    # the f32 reference with correspondingly relaxed tolerances.
    assert jnp.allclose(scores, ref, rtol=2e-2, atol=1e-6), (
        float(jnp.max(jnp.abs(scores - ref))))
    print("KERNEL_OK")
</pallas_src>

<mosaic_0001>
module attributes {stable_mosaic.version = 11 : i64} {
  func.func @_complex_score_kernel(%arg0: i32, %arg1: i32, %arg2: memref<8x128xbf16, #tpu.memory_space<vmem>>, %arg3: memref<128x256xbf16, #tpu.memory_space<vmem>>, %arg4: memref<8x256xf32, #tpu.memory_space<vmem>>) attributes {dimension_semantics = [#tpu.dimension_semantics<parallel>, #tpu.dimension_semantics<parallel>], iteration_bounds = array<i64: 1, 1>, scalar_prefetch = 0 : i64, scratch_operands = 0 : i64, tpu.core_type = #tpu.core_type<tc>, window_params = [{transform_indices = @transform_0, window_bounds = array<i64: 8, 128>}, {transform_indices = @transform_1, window_bounds = array<i64: 128, 256>}, {transform_indices = @transform_2, window_bounds = array<i64: 8, 256>}]} {
    %c0 = arith.constant 0 : index
    %c0_0 = arith.constant 0 : index
    %0 = vector.load %arg2[%c0, %c0_0] : memref<8x128xbf16, #tpu.memory_space<vmem>>, vector<8x128xbf16>
    %c0_i32 = arith.constant 0 : i32
    %c256_i32 = arith.constant 256 : i32
    %1 = arith.muli %c0_i32, %c256_i32 : i32
    %2 = tpu.assume_multiple %1, 256 : i32
    %c0_1 = arith.constant 0 : index
    %3 = arith.index_cast %2 : i32 to index
    %4 = vector.load %arg3[%c0_1, %3] : memref<128x256xbf16, #tpu.memory_space<vmem>>, vector<128x256xbf16>
    %cst = arith.constant dense<0.000000e+00> : vector<8x256xf32>
    %5 = tpu.matmul %0, %4, %cst {dimension_numbers = #tpu.dot_dimension_numbers<[1], [0], [0], [1], [0, 0, 1, 1], [], []>} : vector<8x128xbf16>, vector<128x256xbf16>, vector<8x256xf32> -> vector<8x256xf32>
    %c0_2 = arith.constant 0 : index
    %6 = arith.index_cast %2 : i32 to index
    %7 = vector.load %arg4[%c0_2, %6] : memref<8x256xf32, #tpu.memory_space<vmem>>, vector<8x256xf32>
    tpu.vector_store %arg4[%c0_2, %6], %5 {strides = array<i32>} : memref<8x256xf32, #tpu.memory_space<vmem>>, vector<8x256xf32>,
    %c1_i32 = arith.constant 1 : i32
    return
  }
  func.func @transform_0(%arg0: i32, %arg1: i32) -> (i32, i32) {
    %c0_i32 = arith.constant 0 : i32
    %c0_i32_0 = arith.constant 0 : i32
    return %arg0, %c0_i32 : i32, i32
  }
  func.func @transform_1(%arg0: i32, %arg1: i32) -> (i32, i32) {
    %c0_i32 = arith.constant 0 : i32
    %c0_i32_0 = arith.constant 0 : i32
    return %c0_i32, %arg1 : i32, i32
  }
  func.func @transform_2(%arg0: i32, %arg1: i32) -> (i32, i32) {
    %c0_i32 = arith.constant 0 : i32
    return %arg0, %arg1 : i32, i32
  }
}

</mosaic_0001>

<llo_original>
// kernel: _complex_forward.1
$region0: #{_complex_forward.1}
  #allocation0 [shape = 'u32[]', space=smem, size = 0x4, offset = 0x4, fixed_abs, tag = 'smem constant byte address 0x4 - core index']
  #allocation1 [shape = 'u32[144,128]{1,0:T(1,128)}', space=vmem, size = 0x12000, scoped, tag = 'internal scratch']
  %s0 = inlined_call_operand.vmem [shape: bf16[8,128], index: 0, kind: input, shape index: {}]
  %s1 = inlined_call_operand.vmem [shape: bf16[128,256], index: 1, kind: input, shape index: {}]
  %s2 = inlined_call_operand.hbm [shape: f32[8,256], index: 2, kind: output, shape index: {}]
  %s3 = sld [smem:[#allocation0]]
  $region18: #{_complex_forward.1} parent=0
    _
  %s5 = ssub.s32 1, %s3
  %s6 = scalar_select 0, %s5, %s3
  $region1: #{_complex_forward.1} parent=0
    #allocation2 [shape = 'u8[8192]{0}', space=vmem, size = 0x2000, scoped, tag = 'output window, operand 0, single buffered']
    #allocation3 [shape = 's32[1]{0}', space=sflag, size = 0x4, scoped, tag = 'scoped memory for _complex_forward.1']
    %7 = vsyncpa [#allocation3], 0
    // Predicated region
    $region2: #{_complex_forward.1} parent=1 // pred_check
      _
    $region3: #{_complex_forward.1} parent=1 // pred_check_branch
      %9 = sbr.rel (0) target = $region5
    $region4: #{_complex_forward.1} parent=1 // pred_region
      _
    $region5: #{_complex_forward.1} parent=1 // pred_fallthru
      _
    // Predicated region
    $region6: #{_complex_forward.1} parent=1 // pred_check
      _
    $region7: #{_complex_forward.1} parent=1 // pred_check_branch
      %11 = sbr.rel (0) target = $region9
    $region8: #{_complex_forward.1} parent=1 // pred_region
      _
    $region9: #{_complex_forward.1} parent=1 // pred_fallthru
      _
    %v13 = vld [vmem:[%s0] sm:$0xf]
    %v14 = vld [vmem:[%s1] sm:$0xff]
    %v15 = vld [vmem:[%s1 + $0x8] sm:$0xff]
    %v16 = vld [vmem:[%s1 + $0x10] sm:$0xff]
    %v17 = vld [vmem:[%s1 + $0x18] sm:$0xff]
    %v18 = vld [vmem:[%s1 + $0x20] sm:$0xff]
    %v19 = vld [vmem:[%s1 + $0x28] sm:$0xff]
    %v20 = vld [vmem:[%s1 + $0x30] sm:$0xff]
    %v21 = vld [vmem:[%s1 + $0x38] sm:$0xff]
    %v22 = vld [vmem:[%s1 + $0x40] sm:$0xff]
    %v23 = vld [vmem:[%s1 + $0x48] sm:$0xff]
    %v24 = vld [vmem:[%s1 + $0x50] sm:$0xff]
    %v25 = vld [vmem:[%s1 + $0x58] sm:$0xff]
    %v26 = vld [vmem:[%s1 + $0x60] sm:$0xff]
    %v27 = vld [vmem:[%s1 + $0x68] sm:$0xff]
    %v28 = vld [vmem:[%s1 + $0x70] sm:$0xff]
    %v29 = vld [vmem:[%s1 + $0x78] sm:$0xff]
    %v46 = vunpack.c.l.b16 %v14
    %v47 = vunpack.c.h.b16 %v14
    %v48 = vunpack.c.l.b16 %v15
    %v49 = vunpack.c.h.b16 %v15
    %v50 = vunpack.c.l.b16 %v16
    %v51 = vunpack.c.h.b16 %v16
    %v52 = vunpack.c.l.b16 %v17
    %v53 = vunpack.c.h.b16 %v17
    %v54 = vunpack.c.l.b16 %v18
    %v55 = vunpack.c.h.b16 %v18
    %v56 = vunpack.c.l.b16 %v19
    %v57 = vunpack.c.h.b16 %v19
    %v58 = vunpack.c.l.b16 %v20
    %v59 = vunpack.c.h.b16 %v20
    %v60 = vunpack.c.l.b16 %v21
    %v61 = vunpack.c.h.b16 %v21
    %v62 = vunpack.c.l.b16 %v22
    %v63 = vunpack.c.h.b16 %v22
    %v64 = vunpack.c.l.b16 %v23
    %v65 = vunpack.c.h.b16 %v23
    %v66 = vunpack.c.l.b16 %v24
    %v67 = vunpack.c.h.b16 %v24
    %v68 = vunpack.c.l.b16 %v25
    %v69 = vunpack.c.h.b16 %v25
    %v70 = vunpack.c.l.b16 %v26
    %v71 = vunpack.c.h.b16 %v26
    %v72 = vunpack.c.l.b16 %v27
    %v73 = vunpack.c.h.b16 %v27
    %v74 = vunpack.c.l.b16 %v28
    %v75 = vunpack.c.h.b16 %v28
    %v76 = vunpack.c.l.b16 %v29
    %v77 = vunpack.c.h.b16 %v29
    %v78 = vpack.c.b16 %v48, %v46
    %v79 = vpack.c.b16 %v49, %v47
    %v80 = vpack.c.b16 %v52, %v50
    %v81 = vpack.c.b16 %v53, %v51
    %v82 = vpack.c.b16 %v56, %v54
    %v83 = vpack.c.b16 %v57, %v55
    %v84 = vpack.c.b16 %v60, %v58
    %v85 = vpack.c.b16 %v61, %v59
    %v86 = vpack.c.b16 %v64, %v62
    %v87 = vpack.c.b16 %v65, %v63
    %v88 = vpack.c.b16 %v68, %v66
    %v89 = vpack.c.b16 %v69, %v67
    %v90 = vpack.c.b16 %v72, %v70
    %v91 = vpack.c.b16 %v73, %v71
    %v92 = vpack.c.b16 %v76, %v74
    %v93 = vpack.c.b16 %v77, %v75
    %110 = vmatprep.subr.bf16.mxu0 %v79
    %111 = vmatpush1.bf16.msra.mxu0 %v78
    %112 = vmatprep.subr.bf16.mxu0 %v81
    %113 = vmatpush1.bf16.msra.mxu0 %v80
    %114 = vmatprep.subr.bf16.mxu0 %v83
    %115 = vmatpush1.bf16.msra.mxu0 %v82
    %116 = vmatprep.subr.bf16.mxu0 %v85
    %117 = vmatpush1.bf16.msra.mxu0 %v84
    %118 = vmatprep.subr.bf16.mxu0 %v87
    %119 = vmatpush1.bf16.msra.mxu0 %v86
    %120 = vmatprep.subr.bf16.mxu0 %v89
    %121 = vmatpush1.bf16.msra.mxu0 %v88
    %122 = vmatprep.subr.bf16.mxu0 %v91
    %123 = vmatpush1.bf16.msra.mxu0 %v90
    %124 = vmatprep.subr.bf16.mxu0 %v93
    %125 = vmatpush1.bf16.msra.mxu0 %v92
    %126 = vmatprep.subr.bf16.mxu0 0
    %127 = vmatpush1.bf16.msra.mxu0 0
    %128 = vmatprep.subr.bf16.mxu0 0
    %129 = vmatpush1.bf16.msra.mxu0 0
    %130 = vmatprep.subr.bf16.mxu0 0
    %131 = vmatpush1.bf16.msra.mxu0 0
    %132 = vmatprep.subr.bf16.mxu0 0
    %133 = vmatpush1.bf16.msra.mxu0 0
    %134 = vmatprep.subr.bf16.mxu0 0
    %135 = vmatpush1.bf16.msra.mxu0 0
    %136 = vmatprep.subr.bf16.mxu0 0
    %137 = vmatpush1.bf16.msra.mxu0 0
    %138 = vmatprep.subr.bf16.mxu0 0
    %139 = vmatpush1.bf16.msra.mxu0 0
    %140 = vmatprep.subr.bf16.mxu0 0
    %141 = vmatpush1.bf16.msra.mxu0 0
    %142 = vmatprep.mubr.bf16.mxu0 0
    %143 = vmatmul.mubr.bf16.gmra.mrb[0].mxu0 %v13
    %v144 = vpop.f32.mrb[0].mxu0
    %v145 = vadd.f32 0.0, %v144
    %v146 = vpop.f32.mrb[0].mxu0
    %v147 = vadd.f32 0.0, %v146
    %v148 = vpop.f32.mrb[0].mxu0
    %v149 = vpop.f32.mrb[0].mxu0
    %150 = vdwg.mxu0
    %151 = vst [vmem:[#allocation2] sm:$0xff] %v145
    %152 = vst [vmem:[#allocation2 + $0x8] sm:$0xff] %v147
    // Predicated region
    $region10: #{_complex_forward.1} parent=1 // pred_check
      _
    $region11: #{_complex_forward.1} parent=1 // pred_check_branch
      %154 = sbr.rel (0) target = $region13
    $region12: #{_complex_forward.1} parent=1 // pred_region
      %s156 = ssub.s32 256, 256
      %157 = vsyncadd [#allocation3], %s156
      %s159 = sshll.u32 [#allocation2], 4
      %s160 = int_to_ptr.vmem [resolvable:$true] %s159
      %162 = dma.vmem_to_hbm [thread:$0]  %s160, 256, %s2, [#allocation3]
    $region13: #{_complex_forward.1} parent=1 // pred_fallthru
      _
    // Predicated region
    $region14: #{_complex_forward.1} parent=1 // pred_check
      _
    $region15: #{_complex_forward.1} parent=1 // pred_check_branch
      %164 = sbr.rel (0) target = $region17
    $region16: #{_complex_forward.1} parent=1 // pred_region
      %165 = dma.done [#allocation3], 256
    $region17: #{_complex_forward.1} parent=1 // pred_fallthru
      _
    %166 = vsyncpa [#allocation3], 1

</llo_original>
